<compile_context>
chip_gen: v6e
topology: v6e:2x2x1
jax: 0.10.0
libtpu: 0.0.40
codegen_flags: <defaults>
</compile_context>

<pallas_src>
import functools

import jax
import jax.numpy as jnp
from jax.experimental import pallas as pl
from jax.experimental.pallas import tpu as pltpu


def _critic_kernel(x_ref, w1_ref, b1_ref, w2_ref, b2_ref, w3_ref, b3_ref,
                   o_ref):
    w_dtype = w1_ref.dtype  # MXU input dtype (f32 or bf16); accumulator is f32
    # Layer 1: [tm, S] @ [S, H] on the MXU; bias + ReLU on the f32 accumulator.
    h1 = jnp.dot(x_ref[...], w1_ref[...], preferred_element_type=jnp.float32)
    h1 = jnp.maximum(h1 + b1_ref[...], 0.0)
    # Layer 2: [tm, H] @ [H, H] on the MXU.
    h2 = jnp.dot(h1.astype(w_dtype), w2_ref[...],
                 preferred_element_type=jnp.float32)
    h2 = jnp.maximum(h2 + b2_ref[...], 0.0)
    # Layer 3: degenerate [tm, H] @ [H, 1] -> VPU multiply + lane reduction,
    # keeping the MXU free for the next tile's layer-1/2 matmuls.
    v = jnp.sum(h2 * w3_ref[...], axis=-1, keepdims=True) + b3_ref[...]
    o_ref[...] = v.astype(o_ref.dtype)


def _round_up(x, m):
    return ((x + m - 1) // m) * m


def _fit_block_m(block_m, state_dim, hidden_dim, x_itemsize):
    """Shrink the batch tile until activations + resident weights fit VMEM."""
    # Per-row: x tile (double-buffered, compute dtype) + f32 h1/h2 + cast copy.
    row_bytes = 2 * state_dim * x_itemsize + 3 * hidden_dim * 4
    weight_bytes = (state_dim * hidden_dim + hidden_dim * hidden_dim) * x_itemsize
    budget = 12 * 1024 * 1024  # stay well under the default scoped-VMEM limit
    bm = block_m
    while bm > 64 and bm * row_bytes + weight_bytes > budget:
        bm //= 2
    return bm


def centralized_mappo_critic(global_state, params, *, block_m=512,
                             compute_dtype=jnp.float32):
    """Forward pass of the centralized MAPPO critic.

    Args:
      global_state: f32[batch, state_dim]
      params: dict with w1 [state_dim,H], b1 [1,H], w2 [H,H], b2 [1,H],
              w3 [1,H] (PyTorch row layout), b3 [1,1]
      block_m: max batch rows per grid step (MXU row tile).
      compute_dtype: dtype fed to the MXU matmuls (jnp.bfloat16 recommended on
        v6e/v7x); accumulation/bias/ReLU stay float32.

    Returns:
      f32[batch, 1] state values.
    """
    batch, state_dim = global_state.shape
    hidden_dim = params["w1"].shape[1]
    itemsize = jnp.dtype(compute_dtype).itemsize
    block_m = _fit_block_m(block_m, state_dim, hidden_dim, itemsize)

    # Pick the batch tile:
    #  * single tile for small batches (block == full dim -> always legal)
    #  * exactly 2 tiles for medium batches (v7x megacore: both cores busy)
    #  * block_m otherwise; the last tile may be ragged (Pallas masks it).
    if batch <= block_m:
        bm = batch
    elif batch < 2 * block_m:
        bm = _round_up(pl.cdiv(batch, 2), 8)
    else:
        bm = block_m
    num_tiles = pl.cdiv(batch, bm)

    x = global_state.astype(compute_dtype)
    w1 = params["w1"].astype(compute_dtype)
    w2 = params["w2"].astype(compute_dtype)
    b1 = params["b1"].astype(jnp.float32)
    b2 = params["b2"].astype(jnp.float32)
    w3 = params["w3"].astype(jnp.float32)  # layer 3 runs on the VPU in f32
    b3 = params["b3"].reshape(1, 1).astype(jnp.float32)

    const = lambda i: (0, 0)  # weights/biases: same (whole) block every step

    out = pl.pallas_call(
        _critic_kernel,
        out_shape=jax.ShapeDtypeStruct((batch, 1), jnp.float32),
        grid_spec=pltpu.PrefetchScalarGridSpec(
            num_scalar_prefetch=0,
            grid=(num_tiles,),
            in_specs=[
                pl.BlockSpec((bm, state_dim), lambda i: (i, 0)),   # x tile
                pl.BlockSpec((state_dim, hidden_dim), const),      # w1
                pl.BlockSpec((1, hidden_dim), const),              # b1
                pl.BlockSpec((hidden_dim, hidden_dim), const),     # w2
                pl.BlockSpec((1, hidden_dim), const),              # b2
                pl.BlockSpec((1, hidden_dim), const),              # w3 (row)
                pl.BlockSpec((1, 1), const),                       # b3 (scalar)
            ],
            out_specs=pl.BlockSpec((bm, 1), lambda i: (i, 0)),
        ),
        compiler_params=pltpu.CompilerParams(
            dimension_semantics=("parallel",),
        ),
    )(x, w1, b1, w2, b2, w3, b3)

    return out


def _orthogonal(key, out_features, in_features, gain=1.0):
    """Deterministic orthogonal init matching torch.nn.init.orthogonal_ semantics."""
    rows, cols = out_features, in_features
    flat = jax.random.normal(key, (max(rows, cols), min(rows, cols)), jnp.float32)
    q, r = jnp.linalg.qr(flat)
    d = jnp.sign(jnp.diagonal(r))
    q = q * d[None, :]
    if rows < cols:
        q = q.T
    return gain * q[:rows, :cols]  # PyTorch layout [out, in]


def init_params(key, state_dim, hidden_dim):
    k1, k2, k3 = jax.random.split(key, 3)
    # PyTorch stores [out, in]; transpose w1/w2 to [in, out] for x @ W.
    w1 = _orthogonal(k1, hidden_dim, state_dim).T    # [state_dim, hidden]
    w2 = _orthogonal(k2, hidden_dim, hidden_dim).T   # [hidden, hidden]
    w3 = _orthogonal(k3, 1, hidden_dim)              # [1, hidden] (row, PyTorch layout)
    return {
        "w1": w1, "b1": jnp.zeros((1, hidden_dim), jnp.float32),
        "w2": w2, "b2": jnp.zeros((1, hidden_dim), jnp.float32),
        "w3": w3, "b3": jnp.zeros((1, 1), jnp.float32),
    }


def _reference(global_state, params):
    dot = functools.partial(jnp.dot, precision=jax.lax.Precision.HIGHEST)
    h1 = jnp.maximum(dot(global_state, params["w1"]) + params["b1"], 0.0)
    h2 = jnp.maximum(dot(h1, params["w2"]) + params["b2"], 0.0)
    return jnp.sum(h2 * params["w3"], axis=-1, keepdims=True) + params["b3"]


if __name__ == "__main__":
    # Small, module-consistent shapes: global_state [batch, state_dim].
    batch, state_dim, num_agents, hidden_dim = 8, 32, 3, 32

    key = jax.random.PRNGKey(0)
    k_params, k_state = jax.random.split(key)
    params = init_params(k_params, state_dim, hidden_dim)
    global_state = jax.random.normal(k_state, (batch, state_dim), jnp.float32)

    out = jax.block_until_ready(centralized_mappo_critic(global_state, params))
    ref = _reference(global_state, params)
    assert out.shape == (batch, 1), out.shape
    assert jnp.allclose(out, ref, atol=1e-5, rtol=1e-5), "mismatch vs reference (small f32)"

    # Multi-tile + ragged last tile path (batch=300, tile=128 -> 3 tiles,
    # last tile has 44 valid rows; no wrapper-side padding copy).
    b_r, s_r, h_r = 300, 48, 64
    kp2, ks2 = jax.random.split(jax.random.PRNGKey(1))
    params_r = init_params(kp2, s_r, h_r)
    gs_r = jax.random.normal(ks2, (b_r, s_r), jnp.float32)

    out_r = jax.block_until_ready(
        centralized_mappo_critic(gs_r, params_r, block_m=128))
    ref_r = _reference(gs_r, params_r)
    assert out_r.shape == (b_r, 1), out_r.shape
    assert jnp.allclose(out_r, ref_r, atol=1e-4, rtol=1e-4), "mismatch vs reference (ragged f32)"

    print("KERNEL_OK")
</pallas_src>

<mosaic_0001>
module attributes {stable_mosaic.version = 11 : i64} {
  func.func @_critic_kernel(%arg0: i32, %arg1: memref<8x32xf32, #tpu.memory_space<vmem>>, %arg2: memref<32x32xf32, #tpu.memory_space<vmem>>, %arg3: memref<1x32xf32, #tpu.memory_space<vmem>>, %arg4: memref<32x32xf32, #tpu.memory_space<vmem>>, %arg5: memref<1x32xf32, #tpu.memory_space<vmem>>, %arg6: memref<1x32xf32, #tpu.memory_space<vmem>>, %arg7: memref<1x1xf32, #tpu.memory_space<vmem>>, %arg8: memref<8x1xf32, #tpu.memory_space<vmem>>) attributes {dimension_semantics = [#tpu.dimension_semantics<parallel>], iteration_bounds = array<i64: 1>, scalar_prefetch = 0 : i64, scratch_operands = 0 : i64, tpu.core_type = #tpu.core_type<tc>, window_params = [{transform_indices = @transform_0, window_bounds = array<i64: 8, 32>}, {pipeline_mode = #tpu.pipeline_mode<synchronous>, transform_indices = @transform_1, window_bounds = array<i64: 32, 32>}, {pipeline_mode = #tpu.pipeline_mode<synchronous>, transform_indices = @transform_2, window_bounds = array<i64: 1, 32>}, {pipeline_mode = #tpu.pipeline_mode<synchronous>, transform_indices = @transform_3, window_bounds = array<i64: 32, 32>}, {pipeline_mode = #tpu.pipeline_mode<synchronous>, transform_indices = @transform_4, window_bounds = array<i64: 1, 32>}, {pipeline_mode = #tpu.pipeline_mode<synchronous>, transform_indices = @transform_5, window_bounds = array<i64: 1, 32>}, {pipeline_mode = #tpu.pipeline_mode<synchronous>, transform_indices = @transform_6, window_bounds = array<i64: 1, 1>}, {transform_indices = @transform_7, window_bounds = array<i64: 8, 1>}]} {
    %c0 = arith.constant 0 : index
    %c0_0 = arith.constant 0 : index
    %0 = vector.load %arg1[%c0, %c0_0] : memref<8x32xf32, #tpu.memory_space<vmem>>, vector<8x32xf32>
    %c0_1 = arith.constant 0 : index
    %c0_2 = arith.constant 0 : index
    %1 = vector.load %arg2[%c0_1, %c0_2] : memref<32x32xf32, #tpu.memory_space<vmem>>, vector<32x32xf32>
    %cst = arith.constant dense<0.000000e+00> : vector<8x32xf32>
    %2 = tpu.matmul %0, %1, %cst {dimension_numbers = #tpu.dot_dimension_numbers<[1], [0], [0], [1], [0, 0, 1, 1], [], []>} : vector<8x32xf32>, vector<32x32xf32>, vector<8x32xf32> -> vector<8x32xf32>
    %c0_3 = arith.constant 0 : index
    %c0_4 = arith.constant 0 : index
    %3 = vector.load %arg3[%c0_3, %c0_4] : memref<1x32xf32, #tpu.memory_space<vmem>>, vector<1x32xf32>
    %4 = vector.broadcast %3 : vector<1x32xf32> to vector<8x32xf32>
    %5 = arith.addf %2, %4 : vector<8x32xf32>
    %cst_5 = arith.constant 0.000000e+00 : f32
    %6 = vector.broadcast %cst_5 : f32 to vector<8x32xf32>
    %7 = arith.maximumf %5, %6 : vector<8x32xf32>
    %c0_6 = arith.constant 0 : index
    %c0_7 = arith.constant 0 : index
    %8 = vector.load %arg4[%c0_6, %c0_7] : memref<32x32xf32, #tpu.memory_space<vmem>>, vector<32x32xf32>
    %cst_8 = arith.constant dense<0.000000e+00> : vector<8x32xf32>
    %9 = tpu.matmul %7, %8, %cst_8 {dimension_numbers = #tpu.dot_dimension_numbers<[1], [0], [0], [1], [0, 0, 1, 1], [], []>} : vector<8x32xf32>, vector<32x32xf32>, vector<8x32xf32> -> vector<8x32xf32>
    %c0_9 = arith.constant 0 : index
    %c0_10 = arith.constant 0 : index
    %10 = vector.load %arg5[%c0_9, %c0_10] : memref<1x32xf32, #tpu.memory_space<vmem>>, vector<1x32xf32>
    %11 = vector.broadcast %10 : vector<1x32xf32> to vector<8x32xf32>
    %12 = arith.addf %9, %11 : vector<8x32xf32>
    %cst_11 = arith.constant 0.000000e+00 : f32
    %13 = vector.broadcast %cst_11 : f32 to vector<8x32xf32>
    %14 = arith.maximumf %12, %13 : vector<8x32xf32>
    %c0_12 = arith.constant 0 : index
    %c0_13 = arith.constant 0 : index
    %15 = vector.load %arg6[%c0_12, %c0_13] : memref<1x32xf32, #tpu.memory_space<vmem>>, vector<1x32xf32>
    %16 = vector.broadcast %15 : vector<1x32xf32> to vector<8x32xf32>
    %17 = arith.mulf %14, %16 : vector<8x32xf32>
    %cst_14 = arith.constant dense<0.000000e+00> : vector<8xf32>
    %18 = vector.multi_reduction <add>, %17, %cst_14 [1] : vector<8x32xf32> to vector<8xf32>
    %19 = vector.shape_cast %18 : vector<8xf32> to vector<8x1xf32>
    %c0_15 = arith.constant 0 : index
    %c0_16 = arith.constant 0 : index
    %20 = vector.load %arg7[%c0_15, %c0_16] : memref<1x1xf32, #tpu.memory_space<vmem>>, vector<1x1xf32>
    %21 = vector.broadcast %20 : vector<1x1xf32> to vector<8x1xf32>
    %22 = arith.addf %19, %21 : vector<8x1xf32>
    %c0_17 = arith.constant 0 : index
    %c0_18 = arith.constant 0 : index
    %23 = vector.load %arg8[%c0_17, %c0_18] : memref<8x1xf32, #tpu.memory_space<vmem>>, vector<8x1xf32>
    tpu.vector_store %arg8[%c0_17, %c0_18], %22 {strides = array<i32>} : memref<8x1xf32, #tpu.memory_space<vmem>>, vector<8x1xf32>,
    return
  }
  func.func @transform_0(%arg0: i32) -> (i32, i32) {
    %c0_i32 = arith.constant 0 : i32
    %c0_i32_0 = arith.constant 0 : i32
    return %arg0, %c0_i32 : i32, i32
  }
  func.func @transform_1(%arg0: i32) -> (i32, i32) {
    %c0_i32 = arith.constant 0 : i32
    %c0_i32_0 = arith.constant 0 : i32
    %c0_i32_1 = arith.constant 0 : i32
    return %c0_i32, %c0_i32_0 : i32, i32
  }
  func.func @transform_2(%arg0: i32) -> (i32, i32) {
    %c0_i32 = arith.constant 0 : i32
    %c0_i32_0 = arith.constant 0 : i32
    %c0_i32_1 = arith.constant 0 : i32
    return %c0_i32, %c0_i32_0 : i32, i32
  }
  func.func @transform_3(%arg0: i32) -> (i32, i32) {
    %c0_i32 = arith.constant 0 : i32
    %c0_i32_0 = arith.constant 0 : i32
    %c0_i32_1 = arith.constant 0 : i32
    return %c0_i32, %c0_i32_0 : i32, i32
  }
  func.func @transform_4(%arg0: i32) -> (i32, i32) {
    %c0_i32 = arith.constant 0 : i32
    %c0_i32_0 = arith.constant 0 : i32
    %c0_i32_1 = arith.constant 0 : i32
    return %c0_i32, %c0_i32_0 : i32, i32
  }
  func.func @transform_5(%arg0: i32) -> (i32, i32) {
    %c0_i32 = arith.constant 0 : i32
    %c0_i32_0 = arith.constant 0 : i32
    %c0_i32_1 = arith.constant 0 : i32
    return %c0_i32, %c0_i32_0 : i32, i32
  }
  func.func @transform_6(%arg0: i32) -> (i32, i32) {
    %c0_i32 = arith.constant 0 : i32
    %c0_i32_0 = arith.constant 0 : i32
    %c0_i32_1 = arith.constant 0 : i32
    return %c0_i32, %c0_i32_0 : i32, i32
  }
  func.func @transform_7(%arg0: i32) -> (i32, i32) {
    %c0_i32 = arith.constant 0 : i32
    %c0_i32_0 = arith.constant 0 : i32
    return %arg0, %c0_i32 : i32, i32
  }
}

</mosaic_0001>

<llo_original>
// kernel: tpu_custom_call.1
$region0: #{tpu_custom_call.1}
  #allocation0 [shape = 'u32[]', space=smem, size = 0x4, offset = 0x4, fixed_abs, tag = 'smem constant byte address 0x4 - core index']
  #allocation1 [shape = 'u32[144,128]{1,0:T(1,128)}', space=vmem, size = 0x12000, scoped, tag = 'internal scratch']
  #allocation2 [shape = 'f32[1,1]{1,0:T(1,128)S(1)}', space=vmem, size = 0x200, scoped, tag = 'scoped memory for tpu_custom_call.1']
  %s0 = inlined_call_operand.hbm [shape: f32[8,32], index: 0, kind: input, shape index: {}]
  %s1 = inlined_call_operand.hbm [shape: f32[32,32], index: 1, kind: input, shape index: {}]
  %s2 = inlined_call_operand.vmem [shape: f32[1,32], index: 2, kind: input, shape index: {}]
  %s3 = inlined_call_operand.hbm [shape: f32[32,32], index: 3, kind: input, shape index: {}]
  %s4 = inlined_call_operand.vmem [shape: f32[1,32], index: 4, kind: input, shape index: {}]
  %s5 = inlined_call_operand.vmem [shape: f32[1,32], index: 5, kind: input, shape index: {}]
  %s6 = inlined_call_operand.<no memory space> [shape: f32[1,1], index: 6, kind: input, shape index: {}]
  %s7 = inlined_call_operand.vmem [shape: f32[8,1], index: 7, kind: output, shape index: {}]
  %s8 = sld [smem:[#allocation0]]
  $region50: #{tpu_custom_call.1} parent=0
    _
  %s10 = ssub.s32 1, %s8
  %s11 = scalar_select 0, %s10, %s8
  %v12 = vstv %s6
  %13 = vst [vmem:[#allocation2] sm:$0x1] %v12
  $region1: #{tpu_custom_call.1} parent=0
    #allocation3 [shape = 'u8[4096]{0}', space=vmem, size = 0x1000, scoped, tag = 'input window, operand 0, single buffered']
    #allocation4 [shape = 's32[1]{0}', space=sflag, size = 0x4, scoped, tag = 'scoped memory for tpu_custom_call.1']
    #allocation5 [shape = 'u8[16384]{0}', space=vmem, size = 0x4000, scoped, tag = 'input window, operand 1, single buffered']
    #allocation6 [shape = 's32[1]{0}', space=sflag, size = 0x4, scoped, tag = 'scoped memory for tpu_custom_call.1']
    #allocation7 [shape = 'u8[16384]{0}', space=vmem, size = 0x4000, scoped, tag = 'input window, operand 3, single buffered']
    %14 = vsyncpa [#allocation4], 0
    %15 = vsyncpa [#allocation6], 0
    // Predicated region
    $region2: #{tpu_custom_call.1} parent=1 // pred_check
      _
    $region3: #{tpu_custom_call.1} parent=1 // pred_check_branch
      %17 = sbr.rel (0) target = $region5
    $region4: #{tpu_custom_call.1} parent=1 // pred_region
      %s19 = ssub.s32 128, 128
      %20 = vsyncadd [#allocation4], %s19
      %s22 = sshll.u32 [#allocation3], 4
      %s23 = int_to_ptr.vmem [resolvable:$true] %s22
      %25 = dma.hbm_to_vmem [thread:$0]  %s0, 128, %s23, [#allocation4]
    $region5: #{tpu_custom_call.1} parent=1 // pred_fallthru
      _
    // Predicated region
    $region6: #{tpu_custom_call.1} parent=1 // pred_check
      _
    $region7: #{tpu_custom_call.1} parent=1 // pred_check_branch
      %27 = sbr.rel (0) target = $region9
    $region8: #{tpu_custom_call.1} parent=1 // pred_region
      %s29 = ssub.s32 512, 512
      %30 = vsyncadd [#allocation6], %s29
      %s31 = sshll.u32 [#allocation5], 4
      %s32 = int_to_ptr.vmem [resolvable:$true] %s31
      %37 = dma.hbm_to_vmem [thread:$0]  %s1, 512, %s32, [#allocation6], 128, 128, 8
    $region9: #{tpu_custom_call.1} parent=1 // pred_fallthru
      _
    // Predicated region
    $region10: #{tpu_custom_call.1} parent=1 // pred_check
      _
    $region11: #{tpu_custom_call.1} parent=1 // pred_check_branch
      %39 = sbr.rel (0) target = $region13
    $region12: #{tpu_custom_call.1} parent=1 // pred_region
      _
    $region13: #{tpu_custom_call.1} parent=1 // pred_fallthru
      _
    // Predicated region
    $region14: #{tpu_custom_call.1} parent=1 // pred_check
      _
    $region15: #{tpu_custom_call.1} parent=1 // pred_check_branch
      %41 = sbr.rel (0) target = $region17
    $region16: #{tpu_custom_call.1} parent=1 // pred_region
      %s43 = ssub.s32 512, 512
      %44 = vsyncadd [#allocation6], %s43
      %s45 = sshll.u32 [#allocation7], 4
      %s46 = int_to_ptr.vmem [resolvable:$true] %s45
      %51 = dma.hbm_to_vmem [thread:$0]  %s3, 512, %s46, [#allocation6], 128, 128, 8
    $region17: #{tpu_custom_call.1} parent=1 // pred_fallthru
      _
    // Predicated region
    $region18: #{tpu_custom_call.1} parent=1 // pred_check
      _
    $region19: #{tpu_custom_call.1} parent=1 // pred_check_branch
      %53 = sbr.rel (0) target = $region21
    $region20: #{tpu_custom_call.1} parent=1 // pred_region
      _
    $region21: #{tpu_custom_call.1} parent=1 // pred_fallthru
      _
    // Predicated region
    $region22: #{tpu_custom_call.1} parent=1 // pred_check
      _
    $region23: #{tpu_custom_call.1} parent=1 // pred_check_branch
      %55 = sbr.rel (0) target = $region25
    $region24: #{tpu_custom_call.1} parent=1 // pred_region
      _
    $region25: #{tpu_custom_call.1} parent=1 // pred_fallthru
      _
    // Predicated region
    $region26: #{tpu_custom_call.1} parent=1 // pred_check
      _
    $region27: #{tpu_custom_call.1} parent=1 // pred_check_branch
      %57 = sbr.rel (0) target = $region29
    $region28: #{tpu_custom_call.1} parent=1 // pred_region
      _
    $region29: #{tpu_custom_call.1} parent=1 // pred_fallthru
      _
    // Predicated region
    $region30: #{tpu_custom_call.1} parent=1 // pred_check
      _
    $region31: #{tpu_custom_call.1} parent=1 // pred_check_branch
      %59 = sbr.rel (0) target = $region33
    $region32: #{tpu_custom_call.1} parent=1 // pred_region
      %60 = dma.done [#allocation4], 128
    $region33: #{tpu_custom_call.1} parent=1 // pred_fallthru
      _
    // Predicated region
    $region34: #{tpu_custom_call.1} parent=1 // pred_check
      _
    $region35: #{tpu_custom_call.1} parent=1 // pred_check_branch
      %62 = sbr.rel (0) target = $region37
    $region36: #{tpu_custom_call.1} parent=1 // pred_region
      %63 = dma.done [#allocation6], 512
    $region37: #{tpu_custom_call.1} parent=1 // pred_fallthru
      _
    // Predicated region
    $region38: #{tpu_custom_call.1} parent=1 // pred_check
      _
    $region39: #{tpu_custom_call.1} parent=1 // pred_check_branch
      %65 = sbr.rel (0) target = $region41
    $region40: #{tpu_custom_call.1} parent=1 // pred_region
      %66 = dma.done [#allocation6], 512
    $region41: #{tpu_custom_call.1} parent=1 // pred_fallthru
      _
    %v67 = vld [vmem:[#allocation3] sm:$0xff]
    %v68 = vld [vmem:[#allocation5] sm:$0xff]
    %v69 = vld [vmem:[#allocation5 + $0x8] sm:$0xff]
    %v70 = vld [vmem:[#allocation5 + $0x10] sm:$0xff]
    %v71 = vld [vmem:[#allocation5 + $0x18] sm:$0xff]
    %v72 = vld [vmem:[%s2] sm:$0x1]
    %v74 = vlaneseq
    %v75 = vshrl.u32 %v74, 7
    %v76 = vsub.s32 0, %v75
    %v77 = vrot.slane %v72, %v76
    %vm79 = vcmask 261120
    %v81 = vsel %vm79, %v67, 0
    %83 = vmatprep.subr.mxu0 0.0
    %84 = vmatpush1.msra.mxu0 0.0
    %85 = vmatprep.subr.mxu0 0.0
    %86 = vmatpush1.msra.mxu0 0.0
    %87 = vmatprep.subr.mxu0 0.0
    %88 = vmatpush1.msra.mxu0 0.0
    %89 = vmatprep.subr.mxu0 0.0
    %90 = vmatpush1.msra.mxu0 0.0
    %91 = vmatprep.subr.mxu0 0.0
    %92 = vmatpush1.msra.mxu0 0.0
    %93 = vmatprep.subr.mxu0 0.0
    %94 = vmatpush1.msra.mxu0 0.0
    %95 = vmatprep.subr.mxu0 0.0
    %96 = vmatpush1.msra.mxu0 0.0
    %97 = vmatprep.subr.mxu0 0.0
    %98 = vmatpush1.msra.mxu0 0.0
    %99 = vmatprep.subr.mxu0 0.0
    %100 = vmatpush1.msra.mxu0 0.0
    %101 = vmatprep.subr.mxu0 0.0
    %102 = vmatpush1.msra.mxu0 0.0
    %103 = vmatprep.subr.mxu0 0.0
    %104 = vmatpush1.msra.mxu0 0.0
    %105 = vmatprep.subr.mxu0 0.0
    %106 = vmatpush1.msra.mxu0 0.0
    %107 = vmatprep.subr.mxu0 0.0
    %108 = vmatpush1.msra.mxu0 %v71
    %109 = vmatprep.subr.mxu0 0.0
    %110 = vmatpush1.msra.mxu0 %v70
    %111 = vmatprep.subr.mxu0 0.0
    %112 = vmatpush1.msra.mxu0 %v69
    %113 = vmatprep.subr.mxu0 0.0
    %114 = vmatpush1.msra.mxu0 %v68
    %115 = vmatprep.subr.mxu0 0.0
    %116 = vmatpush2.msra.mxu0 0.0
    %117 = vmatprep.subr.mxu0 0.0
    %118 = vmatpush2.msra.mxu0 0.0
    %119 = vmatprep.subr.mxu0 0.0
    %120 = vmatpush2.msra.mxu0 0.0
    %121 = vmatprep.subr.mxu0 0.0
    %122 = vmatpush2.msra.mxu0 0.0
    %123 = vmatprep.subr.mxu0 0.0
    %124 = vmatpush2.msra.mxu0 0.0
    %125 = vmatprep.subr.mxu0 0.0
    %126 = vmatpush2.msra.mxu0 0.0
    %127 = vmatprep.subr.mxu0 0.0
    %128 = vmatpush2.msra.mxu0 0.0
    %129 = vmatprep.subr.mxu0 0.0
    %130 = vmatpush2.msra.mxu0 0.0
    %131 = vmatprep.subr.mxu0 0.0
    %132 = vmatpush2.msra.mxu0 0.0
    %133 = vmatprep.subr.mxu0 0.0
    %134 = vmatpush2.msra.mxu0 0.0
    %135 = vmatprep.subr.mxu0 0.0
    %136 = vmatpush2.msra.mxu0 0.0
    %137 = vmatprep.subr.mxu0 0.0
    %138 = vmatpush2.msra.mxu0 0.0
    %139 = vmatprep.subr.mxu0 0.0
    %140 = vmatpush2.msra.mxu0 0.0
    %141 = vmatprep.subr.mxu0 0.0
    %142 = vmatpush2.msra.mxu0 0.0
    %143 = vmatprep.subr.mxu0 0.0
    %144 = vmatpush2.msra.mxu0 0.0
    %145 = vmatprep.subr.mxu0 0.0
    %146 = vmatpush2.msra.mxu0 0.0
    %147 = vmatprep.mubr.f32.mxu0 0.0
    %148 = vmatmul.mubr.f32.gmra.mxu0 %v81
    %v149 = vpop.f32.mrf.mxu0
    %v150 = vadd.f32 %v77, %v149
    %v151 = vpop.f32.mrf.mxu0
    %152 = vdwg.mxu0
    %v153 = vmax.f32 %v150, 0.0
    %v154 = vld [vmem:[#allocation7] sm:$0xff]
    %v155 = vld [vmem:[#allocation7 + $0x8] sm:$0xff]
    %v156 = vld [vmem:[#allocation7 + $0x10] sm:$0xff]
    %v157 = vld [vmem:[#allocation7 + $0x18] sm:$0xff]
    %v158 = vld [vmem:[%s4] sm:$0x1]
    %v160 = vlaneseq
    %v161 = vshrl.u32 %v160, 7
    %v162 = vsub.s32 0, %v161
    %v163 = vrot.slane %v158, %v162
    %v166 = vsel %vm79, %v153, 0
    %168 = vmatprep.subr.mxu0 0.0
    %169 = vmatpush1.msra.mxu0 0.0
    %170 = vmatprep.subr.mxu0 0.0
    %171 = vmatpush1.msra.mxu0 0.0
    %172 = vmatprep.subr.mxu0 0.0
    %173 = vmatpush1.msra.mxu0 0.0
    %174 = vmatprep.subr.mxu0 0.0
    %175 = vmatpush1.msra.mxu0 0.0
    %176 = vmatprep.subr.mxu0 0.0
    %177 = vmatpush1.msra.mxu0 0.0
    %178 = vmatprep.subr.mxu0 0.0
    %179 = vmatpush1.msra.mxu0 0.0
    %180 = vmatprep.subr.mxu0 0.0
    %181 = vmatpush1.msra.mxu0 0.0
    %182 = vmatprep.subr.mxu0 0.0
    %183 = vmatpush1.msra.mxu0 0.0
    %184 = vmatprep.subr.mxu0 0.0
    %185 = vmatpush1.msra.mxu0 0.0
    %186 = vmatprep.subr.mxu0 0.0
    %187 = vmatpush1.msra.mxu0 0.0
    %188 = vmatprep.subr.mxu0 0.0
    %189 = vmatpush1.msra.mxu0 0.0
    %190 = vmatprep.subr.mxu0 0.0
    %191 = vmatpush1.msra.mxu0 0.0
    %192 = vmatprep.subr.mxu0 0.0
    %193 = vmatpush1.msra.mxu0 %v157
    %194 = vmatprep.subr.mxu0 0.0
    %195 = vmatpush1.msra.mxu0 %v156
    %196 = vmatprep.subr.mxu0 0.0
    %197 = vmatpush1.msra.mxu0 %v155
    %198 = vmatprep.subr.mxu0 0.0
    %199 = vmatpush1.msra.mxu0 %v154
    %200 = vmatprep.subr.mxu0 0.0
    %201 = vmatpush2.msra.mxu0 0.0
    %202 = vmatprep.subr.mxu0 0.0
    %203 = vmatpush2.msra.mxu0 0.0
    %204 = vmatprep.subr.mxu0 0.0
    %205 = vmatpush2.msra.mxu0 0.0
    %206 = vmatprep.subr.mxu0 0.0
    %207 = vmatpush2.msra.mxu0 0.0
    %208 = vmatprep.subr.mxu0 0.0
    %209 = vmatpush2.msra.mxu0 0.0
    %210 = vmatprep.subr.mxu0 0.0
    %211 = vmatpush2.msra.mxu0 0.0
    %212 = vmatprep.subr.mxu0 0.0
    %213 = vmatpush2.msra.mxu0 0.0
    %214 = vmatprep.subr.mxu0 0.0
    %215 = vmatpush2.msra.mxu0 0.0
    %216 = vmatprep.subr.mxu0 0.0
    %217 = vmatpush2.msra.mxu0 0.0
    %218 = vmatprep.subr.mxu0 0.0
    %219 = vmatpush2.msra.mxu0 0.0
    %220 = vmatprep.subr.mxu0 0.0
    %221 = vmatpush2.msra.mxu0 0.0
    %222 = vmatprep.subr.mxu0 0.0
    %223 = vmatpush2.msra.mxu0 0.0
    %224 = vmatprep.subr.mxu0 0.0
    %225 = vmatpush2.msra.mxu0 0.0
    %226 = vmatprep.subr.mxu0 0.0
    %227 = vmatpush2.msra.mxu0 0.0
    %228 = vmatprep.subr.mxu0 0.0
    %229 = vmatpush2.msra.mxu0 0.0
    %230 = vmatprep.subr.mxu0 0.0
    %231 = vmatpush2.msra.mxu0 0.0
    %232 = vmatprep.mubr.f32.mxu0 0.0
    %233 = vmatmul.mubr.f32.gmra.mxu0 %v166
    %v234 = vpop.f32.mrf.mxu0
    %v235 = vadd.f32 %v163, %v234
    %v236 = vpop.f32.mrf.mxu0
    %237 = vdwg.mxu0
    %v238 = vmax.f32 %v235, 0.0
    %v239 = vld [vmem:[%s5] sm:$0x1]
    %v241 = vlaneseq
    %v242 = vshrl.u32 %v241, 7
    %v243 = vsub.s32 0, %v242
    %v244 = vrot.slane %v239, %v243
    %v246 = vmul.f32 %v238, %v244
    %v247 = vsel %vm79, %v246, 0.0
    %248 = vadd.xlane.f32.xlu0 %v247
    %v249 = vpop.xlane.xlu0 %248
    %v250 = vld [vmem:[#allocation2] sm:$0x1]
    %v252 = vlaneseq
    %v253 = vshrl.u32 %v252, 7
    %v254 = vsub.s32 0, %v253
    %v255 = vrot.slane %v250, %v254
    %v257 = vadd.f32 %v249, %v255
    %vm258 = vcmask 7168
    %259 = vst.msk [vmem:[%s7] sm:$0xff] %vm258, %v257
    // Predicated region
    $region42: #{tpu_custom_call.1} parent=1 // pred_check
      _
    $region43: #{tpu_custom_call.1} parent=1 // pred_check_branch
      %261 = sbr.rel (0) target = $region45
    $region44: #{tpu_custom_call.1} parent=1 // pred_region
      _
    $region45: #{tpu_custom_call.1} parent=1 // pred_fallthru
      _
    // Predicated region
    $region46: #{tpu_custom_call.1} parent=1 // pred_check
      _
    $region47: #{tpu_custom_call.1} parent=1 // pred_check_branch
      %263 = sbr.rel (0) target = $region49
    $region48: #{tpu_custom_call.1} parent=1 // pred_region
      _
    $region49: #{tpu_custom_call.1} parent=1 // pred_fallthru
      _
    %264 = vsyncpa [#allocation4], 1
    %265 = vsyncpa [#allocation6], 1

</llo_original>
